<compile_context>
chip_gen: v5e
topology: v5e:2x2
jax: 0.10.0
libtpu: 0.0.40
codegen_flags: <defaults>
</compile_context>

<pallas_src>
import jax
import jax.numpy as jnp
from jax.experimental import pallas as pl
from jax.experimental.pallas import tpu as pltpu


def _ln_withbias_kernel(x_ref, wb_ref, o_ref):
    # x_ref block: (1, C, T)  -> view as (C, T); normalize over C (axis 0).
    x = x_ref[0].astype(jnp.float32)                      # (C, T)
    mu = jnp.mean(x, axis=0, keepdims=True)               # (1, T)
    xc = x - mu
    var = jnp.mean(xc * xc, axis=0, keepdims=True)        # unbiased=False
    inv = jax.lax.rsqrt(var + 1e-5)                       # EUP rsqrt
    w = wb_ref[0].astype(jnp.float32)                     # (C, 1)
    b = wb_ref[1].astype(jnp.float32)                     # (C, 1)
    o_ref[0] = (xc * inv * w + b).astype(o_ref.dtype)


def _ln_biasfree_kernel(x_ref, w_ref, o_ref):
    # BiasFree (Restormer): y = x * rsqrt(var + eps) * w   (no mean subtraction
    # in the output; variance is still computed about the mean).
    x = x_ref[0].astype(jnp.float32)                      # (C, T)
    mu = jnp.mean(x, axis=0, keepdims=True)
    xc = x - mu
    var = jnp.mean(xc * xc, axis=0, keepdims=True)
    inv = jax.lax.rsqrt(var + 1e-5)
    w = w_ref[...].astype(jnp.float32)                    # (C, 1)
    o_ref[0] = (x * inv * w).astype(o_ref.dtype)


def _choose_tile_hw(C, HW, dtype_bytes, target_bytes=2 << 20):
    """Pick the lane-dim tile: ~target_bytes per block, multiple of 128,
    or the full H*W extent when that is small enough."""
    t = (target_bytes // max(1, C * dtype_bytes)) // 128 * 128
    t = max(128, int(t))
    if t >= HW:
        return HW            # full extent is always a legal block dim
    return t                 # multiple of 128; boundary block may be partial


def layer_norm_nchw(x, weight, bias=None, ln_type="WithBias"):
    """Equivalent to the PyTorch LayerNorm(dim, LayerNorm_type).forward on
    NCHW x (normalizes over the channel axis)."""
    B, C, H, W = x.shape
    HW = H * W
    x3 = x.reshape(B, C, HW)                              # free view of NCHW

    dtype_bytes = jnp.dtype(x.dtype).itemsize
    tile_hw = _choose_tile_hw(C, HW, dtype_bytes)
    grid = (B, pl.cdiv(HW, tile_hw))

    x_spec = pl.BlockSpec((1, C, tile_hw), lambda b, j: (b, 0, j))
    o_spec = pl.BlockSpec((1, C, tile_hw), lambda b, j: (b, 0, j))

    # Double-buffered in + out tiles (~2 MiB each at f32) + params: well under
    # 32 MiB, which is safe on v5e (raises the 16 MiB scoped default), v6e, and
    # v7x (64 MiB physical VMEM).
    compiler_params = pltpu.CompilerParams(
        dimension_semantics=("parallel", "parallel"),
        vmem_limit_bytes=32 * 1024 * 1024,
    )

    if ln_type == "BiasFree":
        w2 = weight.reshape(C, 1)
        return pl.pallas_call(
            _ln_biasfree_kernel,
            out_shape=jax.ShapeDtypeStruct((B, C, HW), x.dtype),
            grid_spec=pltpu.PrefetchScalarGridSpec(
                num_scalar_prefetch=0,
                grid=grid,
                in_specs=[x_spec,
                          pl.BlockSpec((C, 1), lambda b, j: (0, 0))],
                out_specs=o_spec,
            ),
            compiler_params=compiler_params,
        )(x3, w2).reshape(B, C, H, W)
    else:
        # Fuse weight + bias into one resident (2, C, 1) parameter stream.
        wb = jnp.stack([weight, bias], axis=0).reshape(2, C, 1)
        return pl.pallas_call(
            _ln_withbias_kernel,
            out_shape=jax.ShapeDtypeStruct((B, C, HW), x.dtype),
            grid_spec=pltpu.PrefetchScalarGridSpec(
                num_scalar_prefetch=0,
                grid=grid,
                in_specs=[x_spec,
                          pl.BlockSpec((2, C, 1), lambda b, j: (0, 0, 0))],
                out_specs=o_spec,
            ),
            compiler_params=compiler_params,
        )(x3, wb).reshape(B, C, H, W)


def _reference(x, weight, bias, ln_type):
    # Pure-JAX reference of the PyTorch module (normalizes over channels).
    xf = x.astype(jnp.float32)
    mu = jnp.mean(xf, axis=1, keepdims=True)
    var = jnp.mean((xf - mu) ** 2, axis=1, keepdims=True)
    w = weight.reshape(1, -1, 1, 1).astype(jnp.float32)
    if ln_type == "BiasFree":
        y = xf / jnp.sqrt(var + 1e-5) * w
    else:
        b = bias.reshape(1, -1, 1, 1).astype(jnp.float32)
        y = (xf - mu) / jnp.sqrt(var + 1e-5) * w + b
    return y.astype(x.dtype)


if __name__ == "__main__":
    key = jax.random.PRNGKey(0)
    B, C, H, W = 2, 4, 16, 16
    x = jax.random.normal(key, (B, C, H, W), dtype=jnp.float32)

    # deterministic param init (matches nn.Parameter(torch.ones/zeros))
    weight = jnp.ones((C,), dtype=jnp.float32)
    bias = jnp.zeros((C,), dtype=jnp.float32)

    ok = True
    for ln_type in ("WithBias", "BiasFree"):
        out = layer_norm_nchw(x, weight, bias, ln_type=ln_type)
        out = jax.block_until_ready(out)
        ref = _reference(x, weight, bias, ln_type)
        if not jnp.allclose(out, ref, atol=1e-5, rtol=1e-5):
            ok = False

    if ok:
        print("KERNEL_OK")
</pallas_src>

<mosaic_0001>
module attributes {stable_mosaic.version = 11 : i64} {
  func.func @_ln_withbias_kernel(%arg0: i32, %arg1: i32, %arg2: memref<1x4x256xf32, #tpu.memory_space<vmem>>, %arg3: memref<2x4x1xf32, #tpu.memory_space<vmem>>, %arg4: memref<1x4x256xf32, #tpu.memory_space<vmem>>) attributes {dimension_semantics = [#tpu.dimension_semantics<parallel>, #tpu.dimension_semantics<parallel>], iteration_bounds = array<i64: 2, 1>, scalar_prefetch = 0 : i64, scratch_operands = 0 : i64, tpu.core_type = #tpu.core_type<tc>, window_params = [{transform_indices = @transform_0, window_bounds = array<i64: 1, 4, 256>}, {pipeline_mode = #tpu.pipeline_mode<synchronous>, transform_indices = @transform_1, window_bounds = array<i64: 2, 4, 1>}, {transform_indices = @transform_2, window_bounds = array<i64: 1, 4, 256>}]} {
    %c0 = arith.constant 0 : index
    %c0_0 = arith.constant 0 : index
    %c0_1 = arith.constant 0 : index
    %0 = vector.load %arg2[%c0, %c0_0, %c0_1] : memref<1x4x256xf32, #tpu.memory_space<vmem>>, vector<1x4x256xf32>
    %1 = vector.shape_cast %0 : vector<1x4x256xf32> to vector<4x256xf32>
    %cst = arith.constant dense<0.000000e+00> : vector<256xf32>
    %2 = vector.multi_reduction <add>, %1, %cst [0] : vector<4x256xf32> to vector<256xf32>
    %3 = vector.shape_cast %2 : vector<256xf32> to vector<1x256xf32>
    %cst_2 = arith.constant 4.000000e+00 : f32
    %4 = vector.broadcast %cst_2 : f32 to vector<1x256xf32>
    %5 = arith.divf %3, %4 : vector<1x256xf32>
    %6 = vector.broadcast %5 : vector<1x256xf32> to vector<4x256xf32>
    %7 = arith.subf %1, %6 : vector<4x256xf32>
    %8 = arith.mulf %7, %7 : vector<4x256xf32>
    %cst_3 = arith.constant dense<0.000000e+00> : vector<256xf32>
    %9 = vector.multi_reduction <add>, %8, %cst_3 [0] : vector<4x256xf32> to vector<256xf32>
    %10 = vector.shape_cast %9 : vector<256xf32> to vector<1x256xf32>
    %cst_4 = arith.constant 4.000000e+00 : f32
    %11 = vector.broadcast %cst_4 : f32 to vector<1x256xf32>
    %12 = arith.divf %10, %11 : vector<1x256xf32>
    %cst_5 = arith.constant 9.99999974E-6 : f32
    %13 = vector.broadcast %cst_5 : f32 to vector<1x256xf32>
    %14 = arith.addf %12, %13 : vector<1x256xf32>
    %15 = math.rsqrt %14 : vector<1x256xf32>
    %c0_6 = arith.constant 0 : index
    %c0_7 = arith.constant 0 : index
    %c0_8 = arith.constant 0 : index
    %16 = vector.load %arg3[%c0_6, %c0_7, %c0_8] : memref<2x4x1xf32, #tpu.memory_space<vmem>>, vector<1x4x1xf32>
    %17 = vector.shape_cast %16 : vector<1x4x1xf32> to vector<4x1xf32>
    %c1 = arith.constant 1 : index
    %c0_9 = arith.constant 0 : index
    %c0_10 = arith.constant 0 : index
    %18 = vector.load %arg3[%c1, %c0_9, %c0_10] : memref<2x4x1xf32, #tpu.memory_space<vmem>>, vector<1x4x1xf32>
    %19 = vector.shape_cast %18 : vector<1x4x1xf32> to vector<4x1xf32>
    %20 = vector.broadcast %15 : vector<1x256xf32> to vector<4x256xf32>
    %21 = arith.mulf %7, %20 : vector<4x256xf32>
    %22 = vector.broadcast %17 : vector<4x1xf32> to vector<4x256xf32>
    %23 = arith.mulf %21, %22 : vector<4x256xf32>
    %24 = vector.broadcast %19 : vector<4x1xf32> to vector<4x256xf32>
    %25 = arith.addf %23, %24 : vector<4x256xf32>
    %c0_11 = arith.constant 0 : index
    %c0_12 = arith.constant 0 : index
    %c0_13 = arith.constant 0 : index
    %26 = vector.load %arg4[%c0_11, %c0_12, %c0_13] : memref<1x4x256xf32, #tpu.memory_space<vmem>>, vector<1x4x256xf32>
    %27 = vector.shape_cast %26 : vector<1x4x256xf32> to vector<4x256xf32>
    %28 = vector.shape_cast %25 : vector<4x256xf32> to vector<1x4x256xf32>
    tpu.vector_store %arg4[%c0_11, %c0_12, %c0_13], %28 {strides = array<i32>} : memref<1x4x256xf32, #tpu.memory_space<vmem>>, vector<1x4x256xf32>,
    return
  }
  func.func @transform_0(%arg0: i32, %arg1: i32) -> (i32, i32, i32) {
    %c0_i32 = arith.constant 0 : i32
    %c0_i32_0 = arith.constant 0 : i32
    return %arg0, %c0_i32, %arg1 : i32, i32, i32
  }
  func.func @transform_1(%arg0: i32, %arg1: i32) -> (i32, i32, i32) {
    %c0_i32 = arith.constant 0 : i32
    %c0_i32_0 = arith.constant 0 : i32
    %c0_i32_1 = arith.constant 0 : i32
    %c0_i32_2 = arith.constant 0 : i32
    return %c0_i32, %c0_i32_0, %c0_i32_1 : i32, i32, i32
  }
  func.func @transform_2(%arg0: i32, %arg1: i32) -> (i32, i32, i32) {
    %c0_i32 = arith.constant 0 : i32
    %c0_i32_0 = arith.constant 0 : i32
    return %arg0, %c0_i32, %arg1 : i32, i32, i32
  }
}

</mosaic_0001>

<llo_original>
// kernel: tpu_custom_call.1
$region0: #{tpu_custom_call.1}
  #allocation0 [shape = 'u32[]', space=smem, size = 0x4, offset = 0x4, fixed_abs, tag = 'smem constant byte address 0x4 - core index']
  #allocation1 [shape = 'u32[72,128]{1,0:T(1,128)}', space=vmem, size = 0x9000, scoped, tag = 'internal scratch']
  %s0 = inlined_call_operand.hbm [shape: f32[2,4,256], index: 0, kind: input, shape index: {}]
  %s1 = inlined_call_operand.vmem [shape: f32[2,4,1], index: 1, kind: input, shape index: {}]
  %s2 = inlined_call_operand.hbm [shape: f32[2,4,256], index: 2, kind: output, shape index: {}]
  %s3 = sld [smem:[#allocation0]]
  $region45: #{tpu_custom_call.1} parent=0
    _
  %s5 = ssub.s32 1, %s3
  %s6 = scalar_select 0, %s5, %s3
  $region1: #{tpu_custom_call.1} parent=0
    #allocation2 [shape = 'u8[8192]{0}', space=vmem, size = 0x2000, scoped, tag = 'input window, operand 0']
    #allocation3 [shape = 's32[2]{0}', space=sflag, size = 0x8, scoped, tag = 'scoped memory for tpu_custom_call.1']
    #allocation4 [shape = 's32[2]{0}', space=sflag, size = 0x8, scoped, tag = 'scoped memory for tpu_custom_call.1']
    #allocation5 [shape = 'u8[8192]{0}', space=vmem, size = 0x2000, scoped, tag = 'output window, operand 0']
    %7 = vsyncpa [#allocation3], 0
    %s8 = scalar_lea.sflag [#allocation3], 1
    %9 = vsyncpa %s8, 0
    %10 = vsyncpa [#allocation4], 0
    %s11 = scalar_lea.sflag [#allocation4], 1
    %12 = vsyncpa %s11, 0
    loop: start=0, step=1, limit=4
    $region2: #{tpu_custom_call.1} parent=1 // loop_pre_header
      _
    $region3: #{tpu_custom_call.1} parent=1 // loop_header
      %s14 = sphi 0, %s18
      %p15 = scmp.ge.s32.totalorder %s14, 4
      %s21 = sphi 0, %s33
      %s22 = sphi 0, %s29
      %s23 = sphi 0, %s21
      %s24 = sphi 0, %s22
      %s25 = sphi 0, %s23
      %s26 = sphi 0, %s24
      %s38 = sphi 0, %s40
      %s41 = sphi 0, %s38
      %s42 = sphi 0, %s41
      %s58 = sphi 0, %s42
      %s62 = sphi 0, %s62
      %s64 = sphi 0, %s62
      %s65 = sphi 0, %s64
      %s79 = sphi 0, %s65
      %s87 = sphi 0, %s89
      %s90 = sphi 0, %s87
      %s91 = sphi 0, %s90
      %s107 = sphi 0, %s91
    $region4: #{tpu_custom_call.1} parent=1 // loop_header_branch
      %17 = sbr.rel (%p15) target = $region8
    $region5: #{tpu_custom_call.1} parent=1 // loop_body
      %s19 = ssub.s32 %s14, 1
      %s20 = ssub.s32 %s14, 2
      %s27 = sadd.s32 1, %s22
      %p28 = scmp.ge.s32.totalorder %s27, 1
      %s29 = scalar_select %p28, 0, %s27
      %s30 = sadd.s32 1, %s21
      %s31 = scalar_select %p28, %s30, %s21
      %p32 = scmp.ge.s32.totalorder %s31, 2
      %s33 = scalar_select %p32, 0, %s31
      %s34 = ssub.s32 %s21, %s33
      %s35 = ssub.s32 %s22, %s29
      %s36 = sor.u32 %s34, %s35
      %p37 = scmp.eq.s32.totalorder %s36, 0
      %s39 = sadd.s32 %s38, 1
      %s40 = scalar_select %p37, %s38, %s39
      %p43 = pneg %p37
      %p44 = scmp.eq.s32.totalorder %s14, 1
      %p45 = por %p43, %p44
      %p46 = scmp.ne.s32.totalorder %s38, %s41
      %p47 = scmp.eq.s32.totalorder %s14, 0
      %p48 = por %p46, %p47
      %p49 = scmp.ne.s32.totalorder %s38, %s41
      %p50 = scmp.eq.s32.totalorder %s19, 1
      %p51 = por %p49, %p50
      %p52 = scmp.ne.s32.totalorder %s41, %s42
      %p53 = scmp.eq.s32.totalorder %s19, 0
      %p54 = por %p52, %p53
      %p55 = scmp.ne.s32.totalorder %s41, %s42
      %p56 = scmp.eq.s32.totalorder %s20, 1
      %p57 = por %p55, %p56
      %p59 = scmp.ne.s32.totalorder %s42, %s58
      %p60 = scmp.eq.s32.totalorder %s20, 0
      %p61 = por %p59, %p60
      %s63 = sadd.s32 %s62, 1
      %p66 = scmp.eq.s32.totalorder %s14, 1
      %p67 = scmp.ne.s32.totalorder %s62, %s64
      %p68 = scmp.eq.s32.totalorder %s14, 0
      %p69 = por %p67, %p68
      %p70 = scmp.ne.s32.totalorder %s62, %s64
      %p71 = scmp.eq.s32.totalorder %s19, 1
      %p72 = por %p70, %p71
      %p73 = scmp.ne.s32.totalorder %s64, %s65
      %p74 = scmp.eq.s32.totalorder %s19, 0
      %p75 = por %p73, %p74
      %p76 = scmp.ne.s32.totalorder %s64, %s65
      %p77 = scmp.eq.s32.totalorder %s20, 1
      %p78 = por %p76, %p77
      %p80 = scmp.ne.s32.totalorder %s65, %s79
      %p81 = scmp.eq.s32.totalorder %s20, 0
      %p82 = por %p80, %p81
      %s83 = ssub.s32 %s21, %s33
      %s84 = ssub.s32 %s22, %s29
      %s85 = sor.u32 %s83, %s84
      %p86 = scmp.eq.s32.totalorder %s85, 0
      %s88 = sadd.s32 %s87, 1
      %s89 = scalar_select %p86, %s87, %s88
      %p92 = pneg %p86
      %p93 = scmp.eq.s32.totalorder %s14, 1
      %p94 = por %p92, %p93
      %p95 = scmp.ne.s32.totalorder %s87, %s90
      %p96 = scmp.eq.s32.totalorder %s14, 0
      %p97 = por %p95, %p96
      %p98 = scmp.ne.s32.totalorder %s87, %s90
      %p99 = scmp.eq.s32.totalorder %s19, 1
      %p100 = por %p98, %p99
      %p101 = scmp.ne.s32.totalorder %s90, %s91
      %p102 = scmp.eq.s32.totalorder %s19, 0
      %p103 = por %p101, %p102
      %p104 = scmp.ne.s32.totalorder %s90, %s91
      %p105 = scmp.eq.s32.totalorder %s20, 1
      %p106 = por %p104, %p105
      %p108 = scmp.ne.s32.totalorder %s91, %s107
      %p109 = scmp.eq.s32.totalorder %s20, 0
      %p110 = por %p108, %p109
      %p111 = scmp.le.s32.totalorder 1, %s14
      %p112 = scmp.lt.s32.totalorder %s14, 3
      %p113 = pnand %p111, %p112
      %p114 = pneg %p113
      // Predicated region
      $region9: #{tpu_custom_call.1} parent=5 // pred_check
        _
      $region10: #{tpu_custom_call.1} parent=5 // pred_check_branch
        %116 = sbr.rel (%p113) target = $region12
      $region11: #{tpu_custom_call.1} parent=5 // pred_region
        %s117 = ssub.s32 %s14, 1
        // Predicated region
        $region13: #{tpu_custom_call.1} parent=11 // pred_check
          %p118 = pneg %p75
        $region14: #{tpu_custom_call.1} parent=11 // pred_check_branch
          %120 = sbr.rel (%p118) target = $region16
        $region15: #{tpu_custom_call.1} parent=11 // pred_region
          _
        $region16: #{tpu_custom_call.1} parent=11 // pred_fallthru
          _
      $region12: #{tpu_custom_call.1} parent=5 // pred_fallthru
        _
      %p121 = scmp.lt.s32.totalorder %s14, 2
      // Predicated region
      $region17: #{tpu_custom_call.1} parent=5 // pred_check
        %p122 = pneg %p121
      $region18: #{tpu_custom_call.1} parent=5 // pred_check_branch
        %124 = sbr.rel (%p122) target = $region20
      $region19: #{tpu_custom_call.1} parent=5 // pred_region
        // Predicated region
        $region21: #{tpu_custom_call.1} parent=19 // pred_check
          %p125 = pneg %p48
        $region22: #{tpu_custom_call.1} parent=19 // pred_check_branch
          %127 = sbr.rel (%p125) target = $region24
        $region23: #{tpu_custom_call.1} parent=19 // pred_region
          %s128 = sand.u32 %s38, 1
          %s129 = scalar_lea.sflag [#allocation3], %s128
          %s130 = sand.u32 %s38, 1
          %s131 = smul.addr %s130, 8
          %s132 = scalar_lea.vmem [#allocation2], %s131
          %s133 = smul.u32 2, %s22
          %135 = vsyncadd %s129, 0
          %s136 = smul.addr %s21, 2
          %s137 = sadd.s32 %s133, %s136
          %s138 = smul.addr %s137, 4
          %s139 = scalar_lea.hbm %s0, %s138
          %s141 = sshll.u32 %s139, 4
          %s142 = int_to_ptr.hbm [resolvable:$true] %s141
          %s143 = sshll.u32 %s132, 4
          %s144 = int_to_ptr.vmem [resolvable:$true] %s143
          %146 = dma.hbm_to_vmem [thread:$0]  %s142, 128, %s144, %s129
        $region24: #{tpu_custom_call.1} parent=19 // pred_fallthru
          _
      $region20: #{tpu_custom_call.1} parent=5 // pred_fallthru
        _
      %p147 = scmp.le.s32.totalorder 1, %s14
      %p148 = scmp.lt.s32.totalorder %s14, 3
      %p149 = pnand %p147, %p148
      %p150 = pneg %p149
      // Predicated region
      $region25: #{tpu_custom_call.1} parent=5 // pred_check
        _
      $region26: #{tpu_custom_call.1} parent=5 // pred_check_branch
        %152 = sbr.rel (%p149) target = $region28
      $region27: #{tpu_custom_call.1} parent=5 // pred_region
        %s153 = ssub.s32 %s14, 1
        %s154 = sand.u32 %s41, 1
        %s155 = scalar_lea.sflag [#allocation3], %s154
        %s156 = sand.u32 %s41, 1
        %s157 = smul.addr %s156, 8
        %s158 = scalar_lea.vmem [#allocation2], %s157
        // Predicated region
        $region29: #{tpu_custom_call.1} parent=27 // pred_check
          %p159 = pneg %p54
        $region30: #{tpu_custom_call.1} parent=27 // pred_check_branch
          %161 = sbr.rel (%p159) target = $region32
        $region31: #{tpu_custom_call.1} parent=27 // pred_region
          %163 = dma.done %s155, 128
        $region32: #{tpu_custom_call.1} parent=27 // pred_fallthru
          _
        %s164 = sand.u32 %s41, 1
        %s165 = scalar_lea.sflag [#allocation3], %s164
        %s166 = sand.u32 %s41, 1
        %s167 = smul.addr %s166, 8
        %s168 = scalar_lea.vmem [#allocation2], %s167
        %p169 = pneg %p54
        %p170 = pneg %p51
        %p171 = pneg %p75
        %p172 = pneg %p72
        %p173 = pneg %p103
        %p174 = pneg %p100
        %s175 = sand.u32 %s90, 1
        %s176 = scalar_lea.sflag [#allocation4], %s175
        %s177 = sand.u32 %s90, 1
        %s178 = smul.addr %s177, 8
        %s179 = scalar_lea.vmem [#allocation5], %s178
        %s180 = smul.u32 2, %s24
        %s181 = smul.u32 2, %s24
        %v182 = vld [vmem:[%s158] sm:$0xff]
        %184 = vst [vmem:[#allocation1] ss:$2 sm:$0xff] %v182
        %v185 = vld.sshfl [vmem:[#allocation1] sm:$0xff pattern:$0x75316420]
        %v186 = vld.sshfl [vmem:[#allocation1 + $0x8] sm:$0xff pattern:$0x75316420]
        %vm189 = vcmask 1043456
        %v190 = vsel %vm189, %v185, 0.0
        %v191 = vrot.slane %v190, 4
        %v192 = vadd.f32 %v190, %v191
        %v193 = vrot.slane %v192, 2
        %v194 = vadd.f32 %v192, %v193
        %v195 = vrot.slane %v194, 1
        %v196 = vadd.f32 %v194, %v195
        %v197 = vsel %vm189, %v186, 0.0
        %v198 = vrot.slane %v197, 4
        %v199 = vadd.f32 %v197, %v198
        %v200 = vrot.slane %v199, 2
        %v201 = vadd.f32 %v199, %v200
        %v202 = vrot.slane %v201, 1
        %v203 = vadd.f32 %v201, %v202
        %v204 = vrcp.pop 4.0
        %v205 = vmul.f32 4.0, %v204
        %v206 = vsub.f32 1.0, %v205
        %v207 = vmul.f32 %v204, %v206
        %v208 = vadd.f32 %v204, %v207
        %vm209 = vweird.f32 %v204
        %v210 = vsel %vm209, %v204, %v208
        %v211 = vmul.f32 %v196, %v210
        %v212 = vmul.f32 %v203, %v210
        %v215 = vrot.slane %v212, 4
        %v216 = vsel %vm189, %v211, %v215
        %v218 = vsub.f32 %v182, %v216
        %v219 = vmul.f32 %v218, %v218
        %221 = vst [vmem:[#allocation1] ss:$2 sm:$0xff] %v219
        %v222 = vld.sshfl [vmem:[#allocation1] sm:$0xff pattern:$0x75316420]
        %v223 = vld.sshfl [vmem:[#allocation1 + $0x8] sm:$0xff pattern:$0x75316420]
        %v226 = vsel %vm189, %v222, 0.0
        %v227 = vrot.slane %v226, 4
        %v228 = vadd.f32 %v226, %v227
        %v229 = vrot.slane %v228, 2
        %v230 = vadd.f32 %v228, %v229
        %v231 = vrot.slane %v230, 1
        %v232 = vadd.f32 %v230, %v231
        %v233 = vsel %vm189, %v223, 0.0
        %v234 = vrot.slane %v233, 4
        %v235 = vadd.f32 %v233, %v234
        %v236 = vrot.slane %v235, 2
        %v237 = vadd.f32 %v235, %v236
        %v238 = vrot.slane %v237, 1
        %v239 = vadd.f32 %v237, %v238
        %v240 = vmul.f32 %v232, %v210
        %v241 = vmul.f32 %v239, %v210
        %v242 = vadd.f32 %v240, 1e-05
        %v243 = vadd.f32 %v241, 1e-05
        %v244 = vrsqrt.pop %v242
        %v245 = vmul.f32 %v244, %v242
        %v246 = vmul.f32 %v245, %v244
        %v247 = vmul.f32 0.5, %v246
        %v248 = vsub.f32 1.5, %v247
        %v249 = vmul.f32 %v244, %v248
        %vm250 = vweird.f32 %v242
        %vm251 = vweird.f32 %v244
        %vm252 = vmor %vm250, %vm251
        %v253 = vsel %vm252, %v244, %v249
        %v254 = vrsqrt.pop %v243
        %v255 = vmul.f32 %v254, %v243
        %v256 = vmul.f32 %v255, %v254
        %v257 = vmul.f32 0.5, %v256
        %v258 = vsub.f32 1.5, %v257
        %v259 = vmul.f32 %v254, %v258
        %vm260 = vweird.f32 %v243
        %vm261 = vweird.f32 %v254
        %vm262 = vmor %vm260, %vm261
        %v263 = vsel %vm262, %v254, %v259
        %v264 = vld [vmem:[%s1] sm:$0xf]
        %s265 = scalar_lea.vmem %s1, 4
        %v266 = vld [vmem:[%s265] sm:$0xf]
        %v269 = vrot.slane %v263, 4
        %v270 = vsel %vm189, %v253, %v269
        %v272 = vmul.f32 %v218, %v270
        %274 = vset.pattern.permute.xlu0 0
        %275 = vperm.xlu0 %274, %v264
        %v276 = vpop.permute.xlu0 %275
        %v278 = vunpack.c.l.s4 839922192
        %v279 = vunpack.c.0.s8 %v278
        %v280 = vperm.slane %v276, %v279
        %v282 = vmul.f32 %v272, %v280
        %284 = vset.pattern.permute.xlu0 0
        %285 = vperm.xlu0 %284, %v266
        %v286 = vpop.permute.xlu0 %285
        %v288 = vunpack.c.l.s4 839922192
        %v289 = vunpack.c.0.s8 %v288
        %v290 = vperm.slane %v286, %v289
        %v292 = vadd.f32 %v282, %v290
        %293 = vst [vmem:[%s179] sm:$0xff] %v292
        %s294 = sand.u32 %s90, 1
        %s295 = scalar_lea.sflag [#allocation4], %s294
        %s296 = sand.u32 %s90, 1
        %s297 = smul.addr %s296, 8
        %s298 = scalar_lea.vmem [#allocation5], %s297
        // Predicated region
        $region33: #{tpu_custom_call.1} parent=27 // pred_check
          %p299 = pneg %p100
        $region34: #{tpu_custom_call.1} parent=27 // pred_check_branch
          %301 = sbr.rel (%p299) target = $region36
        $region35: #{tpu_custom_call.1} parent=27 // pred_region
          %s302 = smul.u32 2, %s24
          %304 = vsyncadd %s295, 0
          %s305 = smul.addr %s23, 2
          %s306 = sadd.s32 %s302, %s305
          %s307 = smul.addr %s306, 4
          %s308 = scalar_lea.hbm %s2, %s307
          %s310 = sshll.u32 %s298, 4
          %s311 = int_to_ptr.vmem [resolvable:$true] %s310
          %s312 = sshll.u32 %s308, 4
          %s313 = int_to_ptr.hbm [resolvable:$true] %s312
          %315 = dma.vmem_to_hbm [thread:$0]  %s311, 128, %s313, %s295
        $region36: #{tpu_custom_call.1} parent=27 // pred_fallthru
          _
      $region28: #{tpu_custom_call.1} parent=5 // pred_fallthru
        _
      %p316 = scmp.le.s32.totalorder 2, %s14
      // Predicated region
      $region37: #{tpu_custom_call.1} parent=5 // pred_check
        %p317 = pneg %p316
      $region38: #{tpu_custom_call.1} parent=5 // pred_check_branch
        %319 = sbr.rel (%p317) target = $region40
      $region39: #{tpu_custom_call.1} parent=5 // pred_region
        %s320 = ssub.s32 %s14, 2
        // Predicated region
        $region41: #{tpu_custom_call.1} parent=39 // pred_check
          %p321 = pneg %p106
        $region42: #{tpu_custom_call.1} parent=39 // pred_check_branch
          %323 = sbr.rel (%p321) target = $region44
        $region43: #{tpu_custom_call.1} parent=39 // pred_region
          %s324 = sand.u32 %s91, 1
          %s325 = scalar_lea.sflag [#allocation4], %s324
          %s326 = sand.u32 %s91, 1
          %s327 = smul.addr %s326, 8
          %s328 = scalar_lea.vmem [#allocation5], %s327
          %330 = dma.done %s325, 128
        $region44: #{tpu_custom_call.1} parent=39 // pred_fallthru
          _
      $region40: #{tpu_custom_call.1} parent=5 // pred_fallthru
        _
    $region6: #{tpu_custom_call.1} parent=1 // loop_footer
      %s18 = sadd.s32 1, %s14
    $region7: #{tpu_custom_call.1} parent=1 // loop_footer_branch
      %13 = sbr.rel target = $region3
    $region8: #{tpu_custom_call.1} parent=1 // loop_exit
      _
    %331 = vsyncpa [#allocation3], 1
    %s332 = scalar_lea.sflag [#allocation3], 1
    %333 = vsyncpa %s332, 1
    %334 = vsyncpa [#allocation4], 1
    %s335 = scalar_lea.sflag [#allocation4], 1
    %336 = vsyncpa %s335, 1

</llo_original>
